<compile_context>
chip_gen: v7x
topology: tpu7x:2x2x1
jax: 0.10.0
libtpu: 0.0.40
codegen_flags: <defaults>
</compile_context>

<pallas_src>
import jax
import jax.numpy as jnp
from jax import lax
from jax.experimental import pallas as pl
from jax.experimental.pallas import tpu as pltpu

# ---------------- module hyper-parameters (small, synthetic) -----------------
B = 2            # batch
C = 64           # channels (c1)
RATIO = 16
CR = C // RATIO  # squeeze dim = 4
H = W = 16       # spatial
HW = H * W       # 256 (lane-dense, multiple of 128)


# ------------------------------- kernel -------------------------------------
def se_kernel(x_ref, w1_ref, w2_ref, o_ref):
    # x_ref : (1, C, HW)   per-batch activation slab
    # w1_ref: (CR, C)      torch Linear layout (out_features, in_features)
    # w2_ref: (C, CR)      torch Linear layout
    # o_ref : (1, C, HW)

    # Squeeze: global average pool over spatial (lane reduction), f32 accumulate.
    mean = jnp.mean(x_ref[...].astype(jnp.float32), axis=-1)          # (1, C)

    # Excitation: contract mean's C axis with each weight's in_features axis
    # directly (no transposes anywhere).
    y = lax.dot_general(mean, w1_ref[...],
                        dimension_numbers=(((1,), (1,)), ((), ())),
                        preferred_element_type=jnp.float32)           # (1, CR)
    y = jnp.maximum(y, 0.0)                                           # ReLU
    y = lax.dot_general(y, w2_ref[...],
                        dimension_numbers=(((1,), (1,)), ((), ())),
                        preferred_element_type=jnp.float32)           # (1, C)
    y = jax.nn.sigmoid(y)

    # Scale: per-channel rescale. Re-read x_ref (cheap VMEM reload) rather than
    # keeping the whole slab live across the excitation chain.
    o_ref[...] = x_ref[...] * y[:, :, None].astype(o_ref.dtype)


# ------------------------------- wrapper -------------------------------------
@jax.jit
def se_forward(x, w1, w2):
    """x: (B, C, H, W). w1: (CR, C), w2: (C, CR) — torch nn.Linear weight layout."""
    b, c, h, w = x.shape
    hw = h * w
    cr = w1.shape[0]
    x3 = x.reshape(b, c, hw)

    itemsize = jnp.dtype(x.dtype).itemsize
    cost = pl.CostEstimate(
        flops=2 * b * c * hw + 4 * b * c * cr,            # GAP + 2 matmuls + rescale
        transcendentals=b * c,                            # sigmoid
        bytes_accessed=2 * b * c * hw * itemsize + 2 * c * cr * 4,
    )

    out = pl.pallas_call(
        se_kernel,
        out_shape=jax.ShapeDtypeStruct((b, c, hw), x.dtype),
        grid=(b,),                                        # per-batch blocks
        in_specs=[
            pl.BlockSpec((1, c, hw), lambda i: (i, 0, 0)),
            pl.BlockSpec((cr, c), lambda i: (0, 0)),
            pl.BlockSpec((c, cr), lambda i: (0, 0)),
        ],
        out_specs=pl.BlockSpec((1, c, hw), lambda i: (i, 0, 0)),
        compiler_params=pltpu.CompilerParams(
            dimension_semantics=("parallel",)),
        cost_estimate=cost,
    )(x3, w1, w2)
    return out.reshape(b, c, h, w)


# --------------------------- pure-JAX reference ------------------------------
def se_ref(x, w1, w2):
    y = jnp.mean(x, axis=(2, 3))                          # (B, C)
    y = jnp.maximum(y @ w1.T, 0.0)
    y = jax.nn.sigmoid(y @ w2.T)
    return x * y[:, :, None, None]


# ---------------------------------- main -------------------------------------
if __name__ == "__main__":
    key = jax.random.PRNGKey(0)
    kx, k1, k2 = jax.random.split(key, 3)

    x = jax.random.normal(kx, (B, C, H, W), jnp.float32)
    # torch.nn.Linear weight layouts: (out_features, in_features)
    w1 = 0.1 * jax.random.normal(k1, (CR, C), jnp.float32)   # l1: c1 -> c1/r
    w2 = 0.1 * jax.random.normal(k2, (C, CR), jnp.float32)   # l2: c1/r -> c1

    out = se_forward(x, w1, w2)
    out = jax.block_until_ready(out)

    ref = se_ref(x, w1, w2)
    assert out.shape == (B, C, H, W)
    assert jnp.allclose(out, ref, atol=1e-5, rtol=1e-5), "mismatch vs reference"

    print("KERNEL_OK")
</pallas_src>

<mosaic_0001>
module attributes {stable_mosaic.version = 11 : i64} {
  func.func @se_kernel(%arg0: i32, %arg1: memref<1x64x256xf32, #tpu.memory_space<vmem>>, %arg2: memref<4x64xf32, #tpu.memory_space<vmem>>, %arg3: memref<64x4xf32, #tpu.memory_space<vmem>>, %arg4: memref<1x64x256xf32, #tpu.memory_space<vmem>>) attributes {dimension_semantics = [#tpu.dimension_semantics<parallel>], iteration_bounds = array<i64: 2>, scalar_prefetch = 0 : i64, scratch_operands = 0 : i64, tpu.core_type = #tpu.core_type<tc>, window_params = [{transform_indices = @transform_0, window_bounds = array<i64: 1, 64, 256>}, {pipeline_mode = #tpu.pipeline_mode<synchronous>, transform_indices = @transform_1, window_bounds = array<i64: 4, 64>}, {pipeline_mode = #tpu.pipeline_mode<synchronous>, transform_indices = @transform_2, window_bounds = array<i64: 64, 4>}, {transform_indices = @transform_3, window_bounds = array<i64: 1, 64, 256>}]} {
    %c0 = arith.constant 0 : index
    %c0_0 = arith.constant 0 : index
    %c0_1 = arith.constant 0 : index
    %0 = vector.load %arg1[%c0, %c0_0, %c0_1] : memref<1x64x256xf32, #tpu.memory_space<vmem>>, vector<1x64x256xf32>
    %cst = arith.constant dense<0.000000e+00> : vector<1x64xf32>
    %1 = vector.multi_reduction <add>, %0, %cst [2] : vector<1x64x256xf32> to vector<1x64xf32>
    %cst_2 = arith.constant 2.560000e+02 : f32
    %2 = vector.broadcast %cst_2 : f32 to vector<1x64xf32>
    %3 = arith.divf %1, %2 : vector<1x64xf32>
    %c0_3 = arith.constant 0 : index
    %c0_4 = arith.constant 0 : index
    %4 = vector.load %arg2[%c0_3, %c0_4] : memref<4x64xf32, #tpu.memory_space<vmem>>, vector<4x64xf32>
    %cst_5 = arith.constant dense<0.000000e+00> : vector<1x4xf32>
    %5 = tpu.matmul %3, %4, %cst_5 {dimension_numbers = #tpu.dot_dimension_numbers<[1], [1], [0], [0], [0, 0, 1, 0], [], []>} : vector<1x64xf32>, vector<4x64xf32>, vector<1x4xf32> -> vector<1x4xf32>
    %cst_6 = arith.constant 0.000000e+00 : f32
    %6 = vector.broadcast %cst_6 : f32 to vector<1x4xf32>
    %7 = arith.maximumf %5, %6 : vector<1x4xf32>
    %c0_7 = arith.constant 0 : index
    %c0_8 = arith.constant 0 : index
    %8 = vector.load %arg3[%c0_7, %c0_8] : memref<64x4xf32, #tpu.memory_space<vmem>>, vector<64x4xf32>
    %cst_9 = arith.constant dense<0.000000e+00> : vector<1x64xf32>
    %9 = tpu.matmul %7, %8, %cst_9 {dimension_numbers = #tpu.dot_dimension_numbers<[1], [1], [0], [0], [0, 0, 1, 0], [], []>} : vector<1x4xf32>, vector<64x4xf32>, vector<1x64xf32> -> vector<1x64xf32>
    %10 = arith.negf %9 : vector<1x64xf32>
    %11 = math.exp %10 : vector<1x64xf32>
    %cst_10 = arith.constant 1.000000e+00 : f32
    %12 = vector.broadcast %cst_10 : f32 to vector<1x64xf32>
    %13 = arith.addf %12, %11 : vector<1x64xf32>
    %14 = arith.divf %12, %13 : vector<1x64xf32>
    %c0_11 = arith.constant 0 : index
    %c0_12 = arith.constant 0 : index
    %c0_13 = arith.constant 0 : index
    %15 = vector.load %arg1[%c0_11, %c0_12, %c0_13] : memref<1x64x256xf32, #tpu.memory_space<vmem>>, vector<1x64x256xf32>
    %16 = vector.shape_cast %14 : vector<1x64xf32> to vector<1x64x1xf32>
    %17 = vector.broadcast %16 : vector<1x64x1xf32> to vector<1x64x256xf32>
    %18 = arith.mulf %15, %17 : vector<1x64x256xf32>
    %c0_14 = arith.constant 0 : index
    %c0_15 = arith.constant 0 : index
    %c0_16 = arith.constant 0 : index
    %19 = vector.load %arg4[%c0_14, %c0_15, %c0_16] : memref<1x64x256xf32, #tpu.memory_space<vmem>>, vector<1x64x256xf32>
    tpu.vector_store %arg4[%c0_14, %c0_15, %c0_16], %18 {strides = array<i32>} : memref<1x64x256xf32, #tpu.memory_space<vmem>>, vector<1x64x256xf32>,
    return
  }
  func.func @transform_0(%arg0: i32) -> (i32, i32, i32) {
    %c0_i32 = arith.constant 0 : i32
    %c0_i32_0 = arith.constant 0 : i32
    %c0_i32_1 = arith.constant 0 : i32
    return %arg0, %c0_i32, %c0_i32_0 : i32, i32, i32
  }
  func.func @transform_1(%arg0: i32) -> (i32, i32) {
    %c0_i32 = arith.constant 0 : i32
    %c0_i32_0 = arith.constant 0 : i32
    %c0_i32_1 = arith.constant 0 : i32
    return %c0_i32, %c0_i32_0 : i32, i32
  }
  func.func @transform_2(%arg0: i32) -> (i32, i32) {
    %c0_i32 = arith.constant 0 : i32
    %c0_i32_0 = arith.constant 0 : i32
    %c0_i32_1 = arith.constant 0 : i32
    return %c0_i32, %c0_i32_0 : i32, i32
  }
  func.func @transform_3(%arg0: i32) -> (i32, i32, i32) {
    %c0_i32 = arith.constant 0 : i32
    %c0_i32_0 = arith.constant 0 : i32
    %c0_i32_1 = arith.constant 0 : i32
    return %arg0, %c0_i32, %c0_i32_0 : i32, i32, i32
  }
}

</mosaic_0001>

<llo_original>
// kernel: se_forward.1
$region0: #{se_forward.1}
  #allocation0 [shape = 'u32[]', space=smem, size = 0x4, offset = 0x4, fixed_abs, tag = 'smem constant byte address 0x4 - core index']
  #allocation1 [shape = 'u32[144,128]{1,0:T(1,128)}', space=vmem, size = 0x12000, scoped, tag = 'internal scratch']
  %s0 = inlined_call_operand.vmem [shape: f32[2,64,256], index: 0, kind: input, shape index: {}]
  %s1 = inlined_call_operand.vmem [shape: f32[4,64], index: 1, kind: input, shape index: {}]
  %s2 = inlined_call_operand.vmem [shape: f32[64,4], index: 2, kind: input, shape index: {}]
  %s3 = inlined_call_operand.vmem [shape: f32[2,64,256], index: 3, kind: output, shape index: {}]
  %s4 = sld [smem:[#allocation0]]
  $region45: #{se_forward.1} parent=0
    _
  %s6 = ssub.s32 1, %s4
  %s7 = scalar_select 0, %s6, %s4
  loop: start=0, step=1, limit=4
  $region2: #{se_forward.1} parent=0 // loop_pre_header
    _
  $region3: #{se_forward.1} parent=0 // loop_header
    %s9 = sphi 0, %s13
    %p10 = scmp.ge.s32.totalorder %s9, 4
    %s19 = sphi 0, %s21
    %s22 = sphi 0, %s19
    %s23 = sphi 0, %s22
    %s39 = sphi 0, %s23
    %s43 = sphi 0, %s43
    %s45 = sphi 0, %s43
    %s46 = sphi 0, %s45
    %s60 = sphi 0, %s46
    %s64 = sphi 0, %s64
    %s66 = sphi 0, %s64
    %s67 = sphi 0, %s66
    %s81 = sphi 0, %s67
    %s87 = sphi 0, %s89
    %s90 = sphi 0, %s87
    %s91 = sphi 0, %s90
    %s107 = sphi 0, %s91
  $region4: #{se_forward.1} parent=0 // loop_header_branch
    %12 = sbr.rel (%p10) target = $region8
  $region5: #{se_forward.1} parent=0 // loop_body
    %s14 = ssub.s32 %s9, 1
    %s15 = ssub.s32 %s9, 2
    %s16 = sadd.s32 %s9, 1
    %s17 = ssub.s32 %s9, %s16
    %p18 = scmp.eq.s32.totalorder %s17, 0
    %s20 = sadd.s32 %s19, 1
    %s21 = scalar_select %p18, %s19, %s20
    %p24 = pneg %p18
    %p25 = scmp.eq.s32.totalorder %s9, 1
    %p26 = por %p24, %p25
    %p27 = scmp.ne.s32.totalorder %s19, %s22
    %p28 = scmp.eq.s32.totalorder %s9, 0
    %p29 = por %p27, %p28
    %p30 = scmp.ne.s32.totalorder %s19, %s22
    %p31 = scmp.eq.s32.totalorder %s14, 1
    %p32 = por %p30, %p31
    %p33 = scmp.ne.s32.totalorder %s22, %s23
    %p34 = scmp.eq.s32.totalorder %s14, 0
    %p35 = por %p33, %p34
    %p36 = scmp.ne.s32.totalorder %s22, %s23
    %p37 = scmp.eq.s32.totalorder %s15, 1
    %p38 = por %p36, %p37
    %p40 = scmp.ne.s32.totalorder %s23, %s39
    %p41 = scmp.eq.s32.totalorder %s15, 0
    %p42 = por %p40, %p41
    %s44 = sadd.s32 %s43, 1
    %p47 = scmp.eq.s32.totalorder %s9, 1
    %p48 = scmp.ne.s32.totalorder %s43, %s45
    %p49 = scmp.eq.s32.totalorder %s9, 0
    %p50 = por %p48, %p49
    %p51 = scmp.ne.s32.totalorder %s43, %s45
    %p52 = scmp.eq.s32.totalorder %s14, 1
    %p53 = por %p51, %p52
    %p54 = scmp.ne.s32.totalorder %s45, %s46
    %p55 = scmp.eq.s32.totalorder %s14, 0
    %p56 = por %p54, %p55
    %p57 = scmp.ne.s32.totalorder %s45, %s46
    %p58 = scmp.eq.s32.totalorder %s15, 1
    %p59 = por %p57, %p58
    %p61 = scmp.ne.s32.totalorder %s46, %s60
    %p62 = scmp.eq.s32.totalorder %s15, 0
    %p63 = por %p61, %p62
    %s65 = sadd.s32 %s64, 1
    %p68 = scmp.eq.s32.totalorder %s9, 1
    %p69 = scmp.ne.s32.totalorder %s64, %s66
    %p70 = scmp.eq.s32.totalorder %s9, 0
    %p71 = por %p69, %p70
    %p72 = scmp.ne.s32.totalorder %s64, %s66
    %p73 = scmp.eq.s32.totalorder %s14, 1
    %p74 = por %p72, %p73
    %p75 = scmp.ne.s32.totalorder %s66, %s67
    %p76 = scmp.eq.s32.totalorder %s14, 0
    %p77 = por %p75, %p76
    %p78 = scmp.ne.s32.totalorder %s66, %s67
    %p79 = scmp.eq.s32.totalorder %s15, 1
    %p80 = por %p78, %p79
    %p82 = scmp.ne.s32.totalorder %s67, %s81
    %p83 = scmp.eq.s32.totalorder %s15, 0
    %p84 = por %p82, %p83
    %s85 = ssub.s32 %s9, %s16
    %p86 = scmp.eq.s32.totalorder %s85, 0
    %s88 = sadd.s32 %s87, 1
    %s89 = scalar_select %p86, %s87, %s88
    %p92 = pneg %p86
    %p93 = scmp.eq.s32.totalorder %s9, 1
    %p94 = por %p92, %p93
    %p95 = scmp.ne.s32.totalorder %s87, %s90
    %p96 = scmp.eq.s32.totalorder %s9, 0
    %p97 = por %p95, %p96
    %p98 = scmp.ne.s32.totalorder %s87, %s90
    %p99 = scmp.eq.s32.totalorder %s14, 1
    %p100 = por %p98, %p99
    %p101 = scmp.ne.s32.totalorder %s90, %s91
    %p102 = scmp.eq.s32.totalorder %s14, 0
    %p103 = por %p101, %p102
    %p104 = scmp.ne.s32.totalorder %s90, %s91
    %p105 = scmp.eq.s32.totalorder %s15, 1
    %p106 = por %p104, %p105
    %p108 = scmp.ne.s32.totalorder %s91, %s107
    %p109 = scmp.eq.s32.totalorder %s15, 0
    %p110 = por %p108, %p109
    %p111 = scmp.le.s32.totalorder 1, %s9
    %p112 = scmp.lt.s32.totalorder %s9, 3
    %p113 = pnand %p111, %p112
    %p114 = pneg %p113
    // Predicated region
    $region9: #{se_forward.1} parent=5 // pred_check
      _
    $region10: #{se_forward.1} parent=5 // pred_check_branch
      %116 = sbr.rel (%p113) target = $region12
    $region11: #{se_forward.1} parent=5 // pred_region
      %s117 = ssub.s32 %s9, 1
      // Predicated region
      $region13: #{se_forward.1} parent=11 // pred_check
        %p118 = pneg %p56
      $region14: #{se_forward.1} parent=11 // pred_check_branch
        %120 = sbr.rel (%p118) target = $region16
      $region15: #{se_forward.1} parent=11 // pred_region
        _
      $region16: #{se_forward.1} parent=11 // pred_fallthru
        _
      // Predicated region
      $region17: #{se_forward.1} parent=11 // pred_check
        %p121 = pneg %p77
      $region18: #{se_forward.1} parent=11 // pred_check_branch
        %123 = sbr.rel (%p121) target = $region20
      $region19: #{se_forward.1} parent=11 // pred_region
        _
      $region20: #{se_forward.1} parent=11 // pred_fallthru
        _
    $region12: #{se_forward.1} parent=5 // pred_fallthru
      _
    %p124 = scmp.lt.s32.totalorder %s9, 2
    // Predicated region
    $region21: #{se_forward.1} parent=5 // pred_check
      %p125 = pneg %p124
    $region22: #{se_forward.1} parent=5 // pred_check_branch
      %127 = sbr.rel (%p125) target = $region24
    $region23: #{se_forward.1} parent=5 // pred_region
      // Predicated region
      $region25: #{se_forward.1} parent=23 // pred_check
        %p128 = pneg %p29
      $region26: #{se_forward.1} parent=23 // pred_check_branch
        %130 = sbr.rel (%p128) target = $region28
      $region27: #{se_forward.1} parent=23 // pred_region
        %p131 = scmp.lt.s32.totalorder %s9, 1
        %s132 = scalar_select %p131, %s9, 1
        %s133 = smul.addr %s132, 16
        %s134 = smul.addr %s133, 8
        %s135 = scalar_lea.vmem %s0, %s134
      $region28: #{se_forward.1} parent=23 // pred_fallthru
        _
    $region24: #{se_forward.1} parent=5 // pred_fallthru
      _
    %p136 = scmp.le.s32.totalorder 1, %s9
    %p137 = scmp.lt.s32.totalorder %s9, 3
    %p138 = pnand %p136, %p137
    %p139 = pneg %p138
    // Predicated region
    $region29: #{se_forward.1} parent=5 // pred_check
      _
    $region30: #{se_forward.1} parent=5 // pred_check_branch
      %141 = sbr.rel (%p138) target = $region32
    $region31: #{se_forward.1} parent=5 // pred_region
      %s142 = ssub.s32 %s9, 1
      %p143 = scmp.lt.s32.totalorder %s14, 1
      %s144 = scalar_select %p143, %s14, 1
      %s145 = smul.addr %s144, 16
      %s146 = smul.addr %s145, 8
      %s147 = scalar_lea.vmem %s0, %s146
      %p148 = pneg %p35
      %p149 = pneg %p32
      %p150 = pneg %p56
      %p151 = pneg %p53
      %p152 = pneg %p77
      %p153 = pneg %p74
      %p154 = pneg %p103
      %p155 = pneg %p100
      %p156 = scmp.lt.s32.totalorder %s14, 1
      %s157 = scalar_select %p156, %s14, 1
      %s158 = smul.addr %s157, 16
      %s159 = smul.addr %s158, 8
      %s160 = scalar_lea.vmem %s3, %s159
      %p161 = scmp.lt.s32.totalorder %s14, 1
      %s162 = scalar_select %p161, %s14, 1
      %s163 = smul.addr %s162, 16
      %s164 = smul.addr %s163, 8
      %s165 = scalar_lea.vmem %s0, %s164
      %p166 = scmp.lt.s32.totalorder %s14, 1
      %s167 = scalar_select %p166, %s14, 1
      %s168 = smul.addr %s167, 16
      %s169 = smul.addr %s168, 8
      %s170 = scalar_lea.vmem %s3, %s169
      %v171 = vld [vmem:[%s165] sm:$0xff]
      %v172 = vld [vmem:[%s165 + $0x8] sm:$0xff]
      %v173 = vld [vmem:[%s165 + $0x10] sm:$0xff]
      %v174 = vld [vmem:[%s165 + $0x18] sm:$0xff]
      %v175 = vld [vmem:[%s165 + $0x20] sm:$0xff]
      %v176 = vld [vmem:[%s165 + $0x28] sm:$0xff]
      %v177 = vld [vmem:[%s165 + $0x30] sm:$0xff]
      %v178 = vld [vmem:[%s165 + $0x38] sm:$0xff]
      %v179 = vld [vmem:[%s165 + $0x40] sm:$0xff]
      %v180 = vld [vmem:[%s165 + $0x48] sm:$0xff]
      %v181 = vld [vmem:[%s165 + $0x50] sm:$0xff]
      %v182 = vld [vmem:[%s165 + $0x58] sm:$0xff]
      %v183 = vld [vmem:[%s165 + $0x60] sm:$0xff]
      %v184 = vld [vmem:[%s165 + $0x68] sm:$0xff]
      %v185 = vld [vmem:[%s165 + $0x70] sm:$0xff]
      %v186 = vld [vmem:[%s165 + $0x78] sm:$0xff]
      %v187 = vadd.f32 %v171, %v172
      %188 = vadd.xlane.f32.xlu0 %v187
      %v189 = vpop.xlane.xlu0 %188
      %v190 = vadd.f32 %v173, %v174
      %191 = vadd.xlane.f32.xlu0 %v190
      %v192 = vpop.xlane.xlu0 %191
      %v193 = vadd.f32 %v175, %v176
      %194 = vadd.xlane.f32.xlu0 %v193
      %v195 = vpop.xlane.xlu0 %194
      %v196 = vadd.f32 %v177, %v178
      %197 = vadd.xlane.f32.xlu0 %v196
      %v198 = vpop.xlane.xlu0 %197
      %v199 = vadd.f32 %v179, %v180
      %200 = vadd.xlane.f32.xlu0 %v199
      %v201 = vpop.xlane.xlu0 %200
      %v202 = vadd.f32 %v181, %v182
      %203 = vadd.xlane.f32.xlu0 %v202
      %v204 = vpop.xlane.xlu0 %203
      %v205 = vadd.f32 %v183, %v184
      %206 = vadd.xlane.f32.xlu0 %v205
      %v207 = vpop.xlane.xlu0 %206
      %v208 = vadd.f32 %v185, %v186
      %209 = vadd.xlane.f32.xlu0 %v208
      %v210 = vpop.xlane.xlu0 %209
      %v211 = vrcp.pop 256.0
      %v212 = vmul.f32 %v189, %v211
      %v213 = vmul.f32 %v192, %v211
      %v214 = vmul.f32 %v195, %v211
      %v215 = vmul.f32 %v198, %v211
      %v216 = vmul.f32 %v201, %v211
      %v217 = vmul.f32 %v204, %v211
      %v218 = vmul.f32 %v207, %v211
      %v219 = vmul.f32 %v210, %v211
      %v220 = vld [vmem:[%s1] sm:$0xf]
      %v229 = vlaneseq
      %v230 = vand.u32 %v229, 127
      %v231 = vlaneseq
      %v232 = vshrl.u32 %v231, 7
      %v233 = vsub.s32 %v230, %v232
      %v234 = vrot.slane %v212, %v233
      %v235 = vadd.s32 %v230, 4294967288
      %v236 = vlaneseq
      %v237 = vshrl.u32 %v236, 7
      %v238 = vsub.s32 %v235, %v237
      %v239 = vrot.slane %v213, %v238
      %vm240 = vcmask 130112
      %v241 = vsel %vm240, %v239, %v234
      %v242 = vadd.s32 %v230, 4294967280
      %v243 = vlaneseq
      %v244 = vshrl.u32 %v243, 7
      %v245 = vsub.s32 %v242, %v244
      %v246 = vrot.slane %v214, %v245
      %vm247 = vcmask 195712
      %v248 = vsel %vm247, %v246, %v241
      %v249 = vadd.s32 %v230, 4294967272
      %v250 = vlaneseq
      %v251 = vshrl.u32 %v250, 7
      %v252 = vsub.s32 %v249, %v251
      %v253 = vrot.slane %v215, %v252
      %vm254 = vcmask 261312
      %v255 = vsel %vm254, %v253, %v248
      %v256 = vadd.s32 %v230, 4294967264
      %v257 = vlaneseq
      %v258 = vshrl.u32 %v257, 7
      %v259 = vsub.s32 %v256, %v258
      %v260 = vrot.slane %v216, %v259
      %vm261 = vcmask 326912
      %v262 = vsel %vm261, %v260, %v255
      %v263 = vadd.s32 %v230, 4294967256
      %v264 = vlaneseq
      %v265 = vshrl.u32 %v264, 7
      %v266 = vsub.s32 %v263, %v265
      %v267 = vrot.slane %v217, %v266
      %vm268 = vcmask 392512
      %v269 = vsel %vm268, %v267, %v262
      %v270 = vadd.s32 %v230, 4294967248
      %v271 = vlaneseq
      %v272 = vshrl.u32 %v271, 7
      %v273 = vsub.s32 %v270, %v272
      %v274 = vrot.slane %v218, %v273
      %vm275 = vcmask 458112
      %v276 = vsel %vm275, %v274, %v269
      %v277 = vadd.s32 %v230, 4294967240
      %v278 = vlaneseq
      %v279 = vshrl.u32 %v278, 7
      %v280 = vsub.s32 %v277, %v279
      %v281 = vrot.slane %v219, %v280
      %vm282 = vcmask 523712
      %v283 = vsel %vm282, %v281, %v276
      %vm284 = vcmask 523264
      %v285 = vsel %vm284, %v283, 0
      %v288 = vsel %vm284, %v220, 0
      %290 = vmatprep.subr.mxu0 0.0
      %291 = vmatpush1.xpose.msra.mxu0 %v288
      %292 = vmatprep.subr.mxu0 0.0
      %293 = vmatpush1.xpose.msra.mxu0 0.0
      %294 = vmatprep.subr.mxu0 0.0
      %295 = vmatpush1.xpose.msra.mxu0 0.0
      %296 = vmatprep.subr.mxu0 0.0
      %297 = vmatpush1.xpose.msra.mxu0 0.0
      %298 = vmatprep.subr.mxu0 0.0
      %299 = vmatpush1.xpose.msra.mxu0 0.0
      %300 = vmatprep.subr.mxu0 0.0
      %301 = vmatpush1.xpose.msra.mxu0 0.0
      %302 = vmatprep.subr.mxu0 0.0
      %303 = vmatpush1.xpose.msra.mxu0 0.0
      %304 = vmatprep.subr.mxu0 0.0
      %305 = vmatpush1.xpose.msra.mxu0 0.0
      %306 = vmatprep.subr.mxu0 0.0
      %307 = vmatpush1.xpose.msra.mxu0 0.0
      %308 = vmatprep.subr.mxu0 0.0
      %309 = vmatpush1.xpose.msra.mxu0 0.0
      %310 = vmatprep.subr.mxu0 0.0
      %311 = vmatpush1.xpose.msra.mxu0 0.0
      %312 = vmatprep.subr.mxu0 0.0
      %313 = vmatpush1.xpose.msra.mxu0 0.0
      %314 = vmatprep.subr.mxu0 0.0
      %315 = vmatpush1.xpose.msra.mxu0 0.0
      %316 = vmatprep.subr.mxu0 0.0
      %317 = vmatpush1.xpose.msra.mxu0 0.0
      %318 = vmatprep.subr.mxu0 0.0
      %319 = vmatpush1.xpose.msra.mxu0 0.0
      %320 = vmatprep.subr.mxu0 0.0
      %321 = vmatpush1.xpose.msra.mxu0 0.0
      %322 = vmatprep.subr.mxu0 0.0
      %323 = vmatpush1.xpose.msra.mxu0 0.0
      %324 = vmatprep.subr.mxu0 0.0
      %325 = vmatpush1.xpose.msra.mxu0 0.0
      %326 = vmatprep.subr.mxu0 0.0
      %327 = vmatpush1.xpose.msra.mxu0 0.0
      %328 = vmatprep.subr.mxu0 0.0
      %329 = vmatpush1.xpose.msra.mxu0 0.0
      %330 = vmatprep.subr.mxu0 0.0
      %331 = vmatpush1.xpose.msra.mxu0 0.0
      %332 = vmatprep.subr.mxu0 0.0
      %333 = vmatpush1.xpose.msra.mxu0 0.0
      %334 = vmatprep.subr.mxu0 0.0
      %335 = vmatpush1.xpose.msra.mxu0 0.0
      %336 = vmatprep.subr.mxu0 0.0
      %337 = vmatpush1.xpose.msra.mxu0 0.0
      %338 = vmatprep.subr.mxu0 0.0
      %339 = vmatpush1.xpose.msra.mxu0 0.0
      %340 = vmatprep.subr.mxu0 0.0
      %341 = vmatpush1.xpose.msra.mxu0 0.0
      %342 = vmatprep.subr.mxu0 0.0
      %343 = vmatpush1.xpose.msra.mxu0 0.0
      %344 = vmatprep.subr.mxu0 0.0
      %345 = vmatpush1.xpose.msra.mxu0 0.0
      %346 = vmatprep.subr.mxu0 0.0
      %347 = vmatpush1.xpose.msra.mxu0 0.0
      %348 = vmatprep.subr.mxu0 0.0
      %349 = vmatpush1.xpose.msra.mxu0 0.0
      %350 = vmatprep.subr.mxu0 0.0
      %351 = vmatpush1.xpose.msra.mxu0 0.0
      %352 = vmatprep.subr.mxu0 0.0
      %353 = vmatpush1.xpose.msra.mxu0 0.0
      %354 = vmatprep.mubr.f32.mxu0 0.0
      %355 = vmatmul.mubr.f32.gmra.mrb[0].mxu0 %v285
      %v356 = vpop.f32.mrb[0].mxu0
      %v357 = vadd.f32 0.0, %v356
      %v358 = vpop.f32.mrb[0].mxu0
      %359 = vdwg.mxu0
      %v360 = vmax.f32 %v357, 0.0
      %v361 = vld [vmem:[%s2] sm:$0xff]
      %v362 = vld [vmem:[%s2 + $0x8] sm:$0xff]
      %v363 = vld [vmem:[%s2 + $0x10] sm:$0xff]
      %v364 = vld [vmem:[%s2 + $0x18] sm:$0xff]
      %v365 = vld [vmem:[%s2 + $0x20] sm:$0xff]
      %v366 = vld [vmem:[%s2 + $0x28] sm:$0xff]
      %v367 = vld [vmem:[%s2 + $0x30] sm:$0xff]
      %v368 = vld [vmem:[%s2 + $0x38] sm:$0xff]
      %vm369 = vcmask 31744
      %v371 = vsel %vm369, %v360, 0
      %v374 = vsel %vm369, %v361, 0
      %v377 = vsel %vm369, %v362, 0
      %v380 = vsel %vm369, %v363, 0
      %v383 = vsel %vm369, %v364, 0
      %v386 = vsel %vm369, %v365, 0
      %v389 = vsel %vm369, %v366, 0
      %v392 = vsel %vm369, %v367, 0
      %v395 = vsel %vm369, %v368, 0
      %397 = vmatprep.subr.mxu0 0.0
      %398 = vmatpush1.xpose.msra.mxu0 %v374
      %399 = vmatprep.subr.mxu0 0.0
      %400 = vmatpush1.xpose.msra.mxu0 %v377
      %401 = vmatprep.subr.mxu0 0.0
      %402 = vmatpush1.xpose.msra.mxu0 %v380
      %403 = vmatprep.subr.mxu0 0.0
      %404 = vmatpush1.xpose.msra.mxu0 %v383
      %405 = vmatprep.subr.mxu0 0.0
      %406 = vmatpush1.xpose.msra.mxu0 %v386
      %407 = vmatprep.subr.mxu0 0.0
      %408 = vmatpush1.xpose.msra.mxu0 %v389
      %409 = vmatprep.subr.mxu0 0.0
      %410 = vmatpush1.xpose.msra.mxu0 %v392
      %411 = vmatprep.subr.mxu0 0.0
      %412 = vmatpush1.xpose.msra.mxu0 %v395
      %413 = vmatprep.subr.mxu0 0.0
      %414 = vmatpush1.xpose.msra.mxu0 0.0
      %415 = vmatprep.subr.mxu0 0.0
      %416 = vmatpush1.xpose.msra.mxu0 0.0
      %417 = vmatprep.subr.mxu0 0.0
      %418 = vmatpush1.xpose.msra.mxu0 0.0
      %419 = vmatprep.subr.mxu0 0.0
      %420 = vmatpush1.xpose.msra.mxu0 0.0
      %421 = vmatprep.subr.mxu0 0.0
      %422 = vmatpush1.xpose.msra.mxu0 0.0
      %423 = vmatprep.subr.mxu0 0.0
      %424 = vmatpush1.xpose.msra.mxu0 0.0
      %425 = vmatprep.subr.mxu0 0.0
      %426 = vmatpush1.xpose.msra.mxu0 0.0
      %427 = vmatprep.subr.mxu0 0.0
      %428 = vmatpush1.xpose.msra.mxu0 0.0
      %429 = vmatprep.subr.mxu0 0.0
      %430 = vmatpush1.xpose.msra.mxu0 0.0
      %431 = vmatprep.subr.mxu0 0.0
      %432 = vmatpush1.xpose.msra.mxu0 0.0
      %433 = vmatprep.subr.mxu0 0.0
      %434 = vmatpush1.xpose.msra.mxu0 0.0
      %435 = vmatprep.subr.mxu0 0.0
      %436 = vmatpush1.xpose.msra.mxu0 0.0
      %437 = vmatprep.subr.mxu0 0.0
      %438 = vmatpush1.xpose.msra.mxu0 0.0
      %439 = vmatprep.subr.mxu0 0.0
      %440 = vmatpush1.xpose.msra.mxu0 0.0
      %441 = vmatprep.subr.mxu0 0.0
      %442 = vmatpush1.xpose.msra.mxu0 0.0
      %443 = vmatprep.subr.mxu0 0.0
      %444 = vmatpush1.xpose.msra.mxu0 0.0
      %445 = vmatprep.subr.mxu0 0.0
      %446 = vmatpush1.xpose.msra.mxu0 0.0
      %447 = vmatprep.subr.mxu0 0.0
      %448 = vmatpush1.xpose.msra.mxu0 0.0
      %449 = vmatprep.subr.mxu0 0.0
      %450 = vmatpush1.xpose.msra.mxu0 0.0
      %451 = vmatprep.subr.mxu0 0.0
      %452 = vmatpush1.xpose.msra.mxu0 0.0
      %453 = vmatprep.subr.mxu0 0.0
      %454 = vmatpush1.xpose.msra.mxu0 0.0
      %455 = vmatprep.subr.mxu0 0.0
      %456 = vmatpush1.xpose.msra.mxu0 0.0
      %457 = vmatprep.subr.mxu0 0.0
      %458 = vmatpush1.xpose.msra.mxu0 0.0
      %459 = vmatprep.subr.mxu0 0.0
      %460 = vmatpush1.xpose.msra.mxu0 0.0
      %461 = vmatprep.mubr.f32.mxu0 0.0
      %462 = vmatmul.mubr.f32.gmra.mrb[0].mxu0 %v371
      %v463 = vpop.f32.mrb[0].mxu0
      %v464 = vadd.f32 0.0, %v463
      %v465 = vpop.f32.mrb[0].mxu0
      %466 = vdwg.mxu0
      %v467 = vxor.u32 %v464, 2147483648
      %v468 = vmul.f32 %v467, 1.442695
      %v469 = vpow.pop %v468
      %v470 = vadd.f32 %v469, 1.0
      %v471 = vrcp.pop %v470
      %v472 = vmul.f32 1.0, %v471
      %v473 = vlaneseq
      %v474 = vshrl.u32 %v473, 7
      %v475 = vsub.s32 0, %v474
      %v476 = vrot.slane %v472, %v475
      %478 = vbcast.lane.b32.xlu0 %v476, 256
      %v479 = vpop.permute.xlu0 %478
      %s481 = sor.u32 256, 8
      %482 = vbcast.lane.b32.xlu0 %v476, %s481
      %v483 = vpop.permute.xlu0 %482
      %s485 = sor.u32 256, 16
      %486 = vbcast.lane.b32.xlu0 %v476, %s485
      %v487 = vpop.permute.xlu0 %486
      %s489 = sor.u32 256, 24
      %490 = vbcast.lane.b32.xlu0 %v476, %s489
      %v491 = vpop.permute.xlu0 %490
      %s493 = sor.u32 256, 32
      %494 = vbcast.lane.b32.xlu0 %v476, %s493
      %v495 = vpop.permute.xlu0 %494
      %s497 = sor.u32 256, 40
      %498 = vbcast.lane.b32.xlu0 %v476, %s497
      %v499 = vpop.permute.xlu0 %498
      %s501 = sor.u32 256, 48
      %502 = vbcast.lane.b32.xlu0 %v476, %s501
      %v503 = vpop.permute.xlu0 %502
      %s505 = sor.u32 256, 56
      %506 = vbcast.lane.b32.xlu0 %v476, %s505
      %v507 = vpop.permute.xlu0 %506
      %v508 = vmul.f32 %v171, %v479
      %v509 = vmul.f32 %v172, %v479
      %v510 = vmul.f32 %v173, %v483
      %v511 = vmul.f32 %v174, %v483
      %v512 = vmul.f32 %v175, %v487
      %v513 = vmul.f32 %v176, %v487
      %v514 = vmul.f32 %v177, %v491
      %v515 = vmul.f32 %v178, %v491
      %v516 = vmul.f32 %v179, %v495
      %v517 = vmul.f32 %v180, %v495
      %v518 = vmul.f32 %v181, %v499
      %v519 = vmul.f32 %v182, %v499
      %v520 = vmul.f32 %v183, %v503
      %v521 = vmul.f32 %v184, %v503
      %v522 = vmul.f32 %v185, %v507
      %v523 = vmul.f32 %v186, %v507
      %524 = vst [vmem:[%s170] sm:$0xff] %v508
      %525 = vst [vmem:[%s170 + $0x8] sm:$0xff] %v509
      %526 = vst [vmem:[%s170 + $0x10] sm:$0xff] %v510
      %527 = vst [vmem:[%s170 + $0x18] sm:$0xff] %v511
      %528 = vst [vmem:[%s170 + $0x20] sm:$0xff] %v512
      %529 = vst [vmem:[%s170 + $0x28] sm:$0xff] %v513
      %530 = vst [vmem:[%s170 + $0x30] sm:$0xff] %v514
      %531 = vst [vmem:[%s170 + $0x38] sm:$0xff] %v515
      %532 = vst [vmem:[%s170 + $0x40] sm:$0xff] %v516
      %533 = vst [vmem:[%s170 + $0x48] sm:$0xff] %v517
      %534 = vst [vmem:[%s170 + $0x50] sm:$0xff] %v518
      %535 = vst [vmem:[%s170 + $0x58] sm:$0xff] %v519
      %536 = vst [vmem:[%s170 + $0x60] sm:$0xff] %v520
      %537 = vst [vmem:[%s170 + $0x68] sm:$0xff] %v521
      %538 = vst [vmem:[%s170 + $0x70] sm:$0xff] %v522
      %539 = vst [vmem:[%s170 + $0x78] sm:$0xff] %v523
      %p540 = scmp.lt.s32.totalorder %s14, 1
      %s541 = scalar_select %p540, %s14, 1
      %s542 = smul.addr %s541, 16
      %s543 = smul.addr %s542, 8
      %s544 = scalar_lea.vmem %s3, %s543
      // Predicated region
      $region33: #{se_forward.1} parent=31 // pred_check
        %p545 = pneg %p100
      $region34: #{se_forward.1} parent=31 // pred_check_branch
        %547 = sbr.rel (%p545) target = $region36
      $region35: #{se_forward.1} parent=31 // pred_region
        _
      $region36: #{se_forward.1} parent=31 // pred_fallthru
        _
    $region32: #{se_forward.1} parent=5 // pred_fallthru
      _
    %p548 = scmp.le.s32.totalorder 2, %s9
    // Predicated region
    $region37: #{se_forward.1} parent=5 // pred_check
      %p549 = pneg %p548
    $region38: #{se_forward.1} parent=5 // pred_check_branch
      %551 = sbr.rel (%p549) target = $region40
    $region39: #{se_forward.1} parent=5 // pred_region
      %s552 = ssub.s32 %s9, 2
      // Predicated region
      $region41: #{se_forward.1} parent=39 // pred_check
        %p553 = pneg %p106
      $region42: #{se_forward.1} parent=39 // pred_check_branch
        %555 = sbr.rel (%p553) target = $region44
      $region43: #{se_forward.1} parent=39 // pred_region
        %p556 = scmp.lt.s32.totalorder %s15, 1
        %s557 = scalar_select %p556, %s15, 1
        %s558 = smul.addr %s557, 16
        %s559 = smul.addr %s558, 8
        %s560 = scalar_lea.vmem %s3, %s559
      $region44: #{se_forward.1} parent=39 // pred_fallthru
        _
    $region40: #{se_forward.1} parent=5 // pred_fallthru
      _
  $region6: #{se_forward.1} parent=0 // loop_footer
    %s13 = sadd.s32 1, %s9
  $region7: #{se_forward.1} parent=0 // loop_footer_branch
    %8 = sbr.rel target = $region3
  $region8: #{se_forward.1} parent=0 // loop_exit
    _

</llo_original>
